<compile_context>
chip_gen: v6e
topology: v6e:2x2x1
jax: 0.10.0
libtpu: 0.0.40
codegen_flags: <defaults>
</compile_context>

<pallas_src>
import functools

import jax
import jax.numpy as jnp
from jax.experimental import pallas as pl
from jax.experimental.pallas import tpu as pltpu


def _swish_kernel(x_ref, o_ref):
    x = x_ref[...]
    xf = x.astype(jnp.float32)
    y = xf * jax.nn.sigmoid(xf)          # lax.logistic -> EUP transcendental slot
    o_ref[...] = y.astype(o_ref.dtype)


_LANE_CANDIDATES = (8192, 4096, 2048, 1024, 512, 256, 128)
# Sublane packing per dtype itemsize: f32 -> 8, bf16/f16 -> 16, int8/fp8 -> 32.
_SUBLANE_MULT = {4: 8, 2: 16, 1: 32}


@functools.lru_cache(maxsize=None)
def _chip_plan():
    """(target_block_bytes_per_buffer, min_grid_steps), tuned per TPU generation."""
    target = 4 * 1024 * 1024   # v6e-class default: 16 MiB total double-buffered
    min_steps = 1
    kind = ""
    try:
        kind = jax.devices()[0].device_kind.lower()
    except Exception:
        pass
    if ("v5 lite" in kind) or ("v5e" in kind) or ("v5lite" in kind):
        # v5e default scoped VMEM is 16 MiB; 3 MiB * (in+out) * 2 = 12 MiB fits.
        target = 3 * 1024 * 1024
    elif "v7" in kind:
        # v7x: highest HBM BW, 2 TCs, 64 MiB VMEM. 6 MiB*4 = 24 MiB < 32 MiB scoped.
        target = 6 * 1024 * 1024
        min_steps = 8
    else:
        # Fallback refinement: a chip with <= ~64 MiB VMEM per core is v7x-like.
        try:
            vmem = pltpu.get_tpu_info().vmem_capacity_bytes
            if vmem <= 80 * 1024 * 1024:
                target = 6 * 1024 * 1024
                min_steps = 8
        except Exception:
            pass
    return target, min_steps


def _pick_block_rows(rows, w, itemsize, target_bytes, min_steps):
    sub = _SUBLANE_MULT.get(itemsize, 8)
    br = max(1, target_bytes // (w * itemsize))
    # Guarantee >= min_steps grid steps (v7x: keep both TensorCores streaming),
    # but only when the input is big enough for the split to be aligned.
    if min_steps > 1 and rows >= min_steps * sub:
        br = min(br, pl.cdiv(rows, min_steps))
    if br >= rows:
        return rows                           # single full-extent block (legal)
    br = max(sub, (br // sub) * sub)          # dtype-aware sublane alignment
    return rows if br >= rows else br


def _swish_2d(x2d: jax.Array) -> jax.Array:
    """Run the elementwise kernel on a (rows, W) view, W a multiple of 128."""
    rows, w = x2d.shape
    itemsize = jnp.dtype(x2d.dtype).itemsize
    target_bytes, min_steps = _chip_plan()
    block_rows = _pick_block_rows(rows, w, itemsize, target_bytes, min_steps)

    grid = (pl.cdiv(rows, block_rows),)       # ragged last block is masked
    return pl.pallas_call(
        _swish_kernel,
        out_shape=jax.ShapeDtypeStruct((rows, w), x2d.dtype),
        grid=grid,
        in_specs=[pl.BlockSpec((block_rows, w), lambda i: (i, 0))],
        out_specs=pl.BlockSpec((block_rows, w), lambda i: (i, 0)),
        compiler_params=pltpu.CompilerParams(
            dimension_semantics=("parallel",),
        ),
    )(x2d)


def _swish_xla(x: jax.Array) -> jax.Array:
    xf = x.astype(jnp.float32)
    return (xf * jax.nn.sigmoid(xf)).astype(x.dtype)


def swish(x: jax.Array) -> jax.Array:
    """Elementwise SiLU over an array of any shape (matches PyTorch Swish)."""
    orig_shape = x.shape
    n = x.size
    if n == 0:
        return x

    x_flat = x.reshape(-1)

    if n % 128 == 0:
        # Fast path: no padding / extra HBM passes. Pick the widest lane dim
        # that evenly divides n so stores are long, unmasked and lane-dense.
        w = next(c for c in _LANE_CANDIDATES if n % c == 0)
        out2d = _swish_2d(x_flat.reshape(n // w, w))
        return out2d.reshape(orig_shape)

    # Rare ragged path: run the kernel on the 128-aligned prefix and compute
    # the (<128-element) tail in plain XLA; no full-array pad/slice passes.
    n_main = (n // 128) * 128
    if n_main == 0:
        return _swish_xla(x_flat).reshape(orig_shape)
    main = x_flat[:n_main]
    tail = x_flat[n_main:]
    w = next(c for c in _LANE_CANDIDATES if n_main % c == 0)
    out_main = _swish_2d(main.reshape(n_main // w, w)).reshape(-1)
    out_tail = _swish_xla(tail)
    return jnp.concatenate([out_main, out_tail]).reshape(orig_shape)


if __name__ == "__main__":
    key = jax.random.PRNGKey(0)
    # Shape consistent with the module's (N, *) contract; NCHW example.
    x = jax.random.normal(key, (2, 4, 16, 16), dtype=jnp.float32)

    y = swish(x)
    jax.block_until_ready(y)

    # Reference check in plain JAX.
    y_ref = x * jax.nn.sigmoid(x)
    assert y.shape == x.shape and y.dtype == x.dtype
    assert jnp.allclose(y, y_ref, atol=1e-6, rtol=1e-6)

    # Also exercise a ragged-size input through the prefix+tail path.
    x2 = jax.random.normal(jax.random.PRNGKey(1), (3, 5, 7), dtype=jnp.float32)
    y2 = swish(x2)
    jax.block_until_ready(y2)
    assert jnp.allclose(y2, x2 * jax.nn.sigmoid(x2), atol=1e-6, rtol=1e-6)

    print("KERNEL_OK")
</pallas_src>

<mosaic_0001>
module attributes {stable_mosaic.version = 11 : i64} {
  func.func @_swish_kernel(%arg0: i32, %arg1: memref<1x2048xf32, #tpu.memory_space<vmem>>, %arg2: memref<1x2048xf32, #tpu.memory_space<vmem>>) attributes {dimension_semantics = [#tpu.dimension_semantics<parallel>], iteration_bounds = array<i64: 1>, scalar_prefetch = 0 : i64, scratch_operands = 0 : i64, tpu.core_type = #tpu.core_type<tc>, window_params = [{transform_indices = @transform_0, window_bounds = array<i64: 1, 2048>}, {transform_indices = @transform_1, window_bounds = array<i64: 1, 2048>}]} {
    %c0 = arith.constant 0 : index
    %c0_0 = arith.constant 0 : index
    %0 = vector.load %arg1[%c0, %c0_0] : memref<1x2048xf32, #tpu.memory_space<vmem>>, vector<1x2048xf32>
    %1 = arith.negf %0 : vector<1x2048xf32>
    %2 = math.exp %1 : vector<1x2048xf32>
    %cst = arith.constant 1.000000e+00 : f32
    %3 = vector.broadcast %cst : f32 to vector<1x2048xf32>
    %4 = arith.addf %3, %2 : vector<1x2048xf32>
    %5 = arith.divf %3, %4 : vector<1x2048xf32>
    %6 = arith.mulf %0, %5 : vector<1x2048xf32>
    %c0_1 = arith.constant 0 : index
    %c0_2 = arith.constant 0 : index
    %7 = vector.load %arg2[%c0_1, %c0_2] : memref<1x2048xf32, #tpu.memory_space<vmem>>, vector<1x2048xf32>
    tpu.vector_store %arg2[%c0_1, %c0_2], %6 {strides = array<i32>} : memref<1x2048xf32, #tpu.memory_space<vmem>>, vector<1x2048xf32>,
    return
  }
  func.func @transform_0(%arg0: i32) -> (i32, i32) {
    %c0_i32 = arith.constant 0 : i32
    %c0_i32_0 = arith.constant 0 : i32
    return %arg0, %c0_i32 : i32, i32
  }
  func.func @transform_1(%arg0: i32) -> (i32, i32) {
    %c0_i32 = arith.constant 0 : i32
    %c0_i32_0 = arith.constant 0 : i32
    return %arg0, %c0_i32 : i32, i32
  }
}

</mosaic_0001>

<llo_original>
// kernel: tpu_custom_call.1
$region0: #{tpu_custom_call.1}
  #allocation0 [shape = 'u32[]', space=smem, size = 0x4, offset = 0x4, fixed_abs, tag = 'smem constant byte address 0x4 - core index']
  #allocation1 [shape = 'u32[144,128]{1,0:T(1,128)}', space=vmem, size = 0x12000, scoped, tag = 'internal scratch']
  %s0 = inlined_call_operand.hbm [shape: f32[1,2048], index: 0, kind: input, shape index: {}]
  %s1 = inlined_call_operand.hbm [shape: f32[1,2048], index: 1, kind: output, shape index: {}]
  %s2 = sld [smem:[#allocation0]]
  $region18: #{tpu_custom_call.1} parent=0
    _
  %s4 = ssub.s32 1, %s2
  %s5 = scalar_select 0, %s4, %s2
  $region1: #{tpu_custom_call.1} parent=0
    #allocation2 [shape = 'u8[8192]{0}', space=vmem, size = 0x2000, scoped, tag = 'input window, operand 0, single buffered']
    #allocation3 [shape = 's32[1]{0}', space=sflag, size = 0x4, scoped, tag = 'scoped memory for tpu_custom_call.1']
    #allocation4 [shape = 's32[1]{0}', space=sflag, size = 0x4, scoped, tag = 'scoped memory for tpu_custom_call.1']
    #allocation5 [shape = 'u8[8192]{0}', space=vmem, size = 0x2000, scoped, tag = 'output window, operand 0, single buffered']
    %6 = vsyncpa [#allocation3], 0
    %7 = vsyncpa [#allocation4], 0
    // Predicated region
    $region2: #{tpu_custom_call.1} parent=1 // pred_check
      _
    $region3: #{tpu_custom_call.1} parent=1 // pred_check_branch
      %9 = sbr.rel (0) target = $region5
    $region4: #{tpu_custom_call.1} parent=1 // pred_region
      %s11 = ssub.s32 256, 256
      %12 = vsyncadd [#allocation3], %s11
      %s14 = sshll.u32 [#allocation2], 4
      %s15 = int_to_ptr.vmem [resolvable:$true] %s14
      %17 = dma.hbm_to_vmem [thread:$0]  %s0, 256, %s15, [#allocation3]
    $region5: #{tpu_custom_call.1} parent=1 // pred_fallthru
      _
    // Predicated region
    $region6: #{tpu_custom_call.1} parent=1 // pred_check
      _
    $region7: #{tpu_custom_call.1} parent=1 // pred_check_branch
      %19 = sbr.rel (0) target = $region9
    $region8: #{tpu_custom_call.1} parent=1 // pred_region
      %20 = dma.done [#allocation3], 256
    $region9: #{tpu_custom_call.1} parent=1 // pred_fallthru
      _
    %v21 = vld [vmem:[#allocation2] sm:$0xff]
    %v22 = vld [vmem:[#allocation2 + $0x8] sm:$0xff]
    %v23 = vxor.u32 %v21, 2147483648
    %v24 = vxor.u32 %v22, 2147483648
    %v25 = vmul.f32 %v23, 1.442695
    %v26 = vpow.pop %v25
    %v27 = vmul.f32 %v24, 1.442695
    %v28 = vpow.pop %v27
    %v29 = vadd.f32 %v26, 1.0
    %v30 = vadd.f32 %v28, 1.0
    %v31 = vrcp.pop %v29
    %v32 = vmul.f32 1.0, %v31
    %v33 = vrcp.pop %v30
    %v34 = vmul.f32 1.0, %v33
    %v35 = vmul.f32 %v21, %v32
    %v36 = vmul.f32 %v22, %v34
    %37 = vst [vmem:[#allocation5] sm:$0xff] %v35
    %38 = vst [vmem:[#allocation5 + $0x8] sm:$0xff] %v36
    // Predicated region
    $region10: #{tpu_custom_call.1} parent=1 // pred_check
      _
    $region11: #{tpu_custom_call.1} parent=1 // pred_check_branch
      %40 = sbr.rel (0) target = $region13
    $region12: #{tpu_custom_call.1} parent=1 // pred_region
      %s42 = ssub.s32 256, 256
      %43 = vsyncadd [#allocation4], %s42
      %s45 = sshll.u32 [#allocation5], 4
      %s46 = int_to_ptr.vmem [resolvable:$true] %s45
      %48 = dma.vmem_to_hbm [thread:$0]  %s46, 256, %s1, [#allocation4]
    $region13: #{tpu_custom_call.1} parent=1 // pred_fallthru
      _
    // Predicated region
    $region14: #{tpu_custom_call.1} parent=1 // pred_check
      _
    $region15: #{tpu_custom_call.1} parent=1 // pred_check_branch
      %50 = sbr.rel (0) target = $region17
    $region16: #{tpu_custom_call.1} parent=1 // pred_region
      %51 = dma.done [#allocation4], 256
    $region17: #{tpu_custom_call.1} parent=1 // pred_fallthru
      _
    %52 = vsyncpa [#allocation3], 1
    %53 = vsyncpa [#allocation4], 1

</llo_original>
